<compile_context>
chip_gen: v6e
topology: v6e:2x2x1
jax: 0.10.0
libtpu: 0.0.40
codegen_flags: <defaults>
</compile_context>

<pallas_src>
import math

import jax
import jax.numpy as jnp
from jax.experimental import pallas as pl
from jax.experimental.pallas import tpu as pltpu


def _round_up(x: int, m: int) -> int:
    return (x + m - 1) // m * m


def _rows_for_bytes(nbytes: int, bytes_per_row: int) -> int:
    return max(8, (nbytes // max(bytes_per_row, 1)) // 32 * 32)


def _pick_row_tile(nrows: int, minor: int, itemsize: int, *, min_steps: int = 8) -> int:
    """Rows per block: <= ~2 MiB (v5e-safe), >= ~256 KiB (amortize per-step
    overhead), and small enough that the grid keeps >= min_steps steps when
    there is enough work (pipelining + v7x dual-TC sharding)."""
    bytes_per_row = max(minor, 128) * itemsize            # lanes pad to 128 in VMEM
    cap = _rows_for_bytes(2 << 20, bytes_per_row)         # block <= ~2 MiB
    floor = _rows_for_bytes(256 << 10, bytes_per_row)     # block >= ~256 KiB
    want = _round_up(pl.cdiv(nrows, min_steps), 32)       # grid >= min_steps steps
    bt = min(cap, max(floor, want))
    return nrows if nrows <= bt else bt


def _make_splice_l1_kernel(d: int, g: int):
    """line width == 1.  Each packed row of `cache_ref` holds `g` logical rows
    of width `d` (minor dim g*d is a multiple of 128 lanes); `line_ref` holds
    the `g` new last-elements for those logical rows."""

    def kernel(cache_ref, line_ref, out_ref):
        c = cache_ref[...]                                    # (bt, g*d), native dtype
        n = c.shape[-1]
        # rolled[:, j] = c[:, (j+1) % n]   (jnp.roll convention; shift = n-1 == -1)
        rolled = pltpu.roll(c, shift=n - 1, axis=1)
        lane = jax.lax.broadcasted_iota(jnp.int32, c.shape, 1)   # compile-time const
        out = rolled
        # Boundary lanes (j % d == d-1) are exactly the lanes the packed roll
        # corrupts and exactly the lanes the splice must overwrite with `line`.
        for k in range(g):
            out = jnp.where(lane == k * d + (d - 1), line_ref[:, k:k + 1], out)
        out_ref[...] = out                                    # one unmasked full store

    return kernel


def _splice_general_kernel(cache_ref, line_ref, out_ref):
    """General line width: build the full (bt, w) row in registers and issue a
    single full-width store (no masked partial stores at lane d-1)."""
    out_ref[...] = jnp.concatenate([cache_ref[:, 1:], line_ref[...]], axis=1)


def splice(cache, line, *, donate_cache: bool = False):
    """out = concatenate(cache[..., 1:], line, axis=-1)  -- SpliceUnit forward."""
    assert cache.shape[:-1] == line.shape[:-1], "leading dims must match"
    d = cache.shape[-1]
    lw = line.shape[-1]
    w = d - 1 + lw
    lead = cache.shape[:-1]
    r = math.prod(lead) if lead else 1
    out_dtype = jnp.promote_types(cache.dtype, line.dtype)

    if d <= 1:                               # cache[..., 1:] is empty
        return line.astype(out_dtype)
    if lw == 0:
        return cache[..., 1:].astype(out_dtype)
    if r == 0:
        return jnp.zeros((*lead, w), out_dtype)

    itemsize = jnp.dtype(out_dtype).itemsize
    c2 = cache.reshape(r, d).astype(out_dtype)
    l2 = line.reshape(r, lw).astype(out_dtype)

    cost = pl.CostEstimate(flops=0, transcendentals=0,
                           bytes_accessed=(r * d + r * lw + r * w) * itemsize)
    cparams = pltpu.CompilerParams(
        dimension_semantics=("parallel",),        # rows independent; shards TCs on v7x
        vmem_limit_bytes=32 * 1024 * 1024,        # explicit: v5e scoped default is 16 MiB
    )

    # ---- lane-dense fast path (KV-cache splice, line width == 1) ----------------
    g = 0
    if lw == 1:
        if d % 128 == 0:
            g = 1                                 # minor dim already lane-dense
        elif 128 % d == 0:
            g = 128 // d                          # pack g logical rows per 128 lanes
    if g:
        pad = (-r) % g
        if pad:                                   # keep the 128-lane path (review)
            c2 = jnp.pad(c2, ((0, pad), (0, 0)))
            l2 = jnp.pad(l2, ((0, pad), (0, 0)))
        rp = (r + pad) // g
        cp = c2.reshape(rp, g * d)                # free row-major reshape
        lp = l2.reshape(rp, g)                    # free row-major reshape
        bt = _pick_row_tile(rp, g * d, itemsize)
        grid = (pl.cdiv(rp, bt),)
        alias = {0: 0} if donate_cache else {}
        out = pl.pallas_call(
            _make_splice_l1_kernel(d, g),
            out_shape=jax.ShapeDtypeStruct((rp, g * d), out_dtype),
            grid_spec=pltpu.PrefetchScalarGridSpec(
                num_scalar_prefetch=0,
                grid=grid,
                in_specs=[
                    pl.BlockSpec((bt, g * d), lambda i: (i, 0)),   # cache, lane-dense
                    pl.BlockSpec((bt, g), lambda i: (i, 0)),       # new last elements
                ],
                out_specs=pl.BlockSpec((bt, g * d), lambda i: (i, 0)),
            ),
            compiler_params=cparams,
            cost_estimate=cost,
            input_output_aliases=alias,
        )(cp, lp)
        out = out.reshape(r + pad, d)
        if pad:
            out = out[:r]
        return out.reshape(*lead, w)

    # ---- general path (any line width, or d that does not pack into 128 lanes) --
    bt = _pick_row_tile(r, max(d, w), itemsize)
    grid = (pl.cdiv(r, bt),)
    out = pl.pallas_call(
        _splice_general_kernel,
        out_shape=jax.ShapeDtypeStruct((r, w), out_dtype),
        grid_spec=pltpu.PrefetchScalarGridSpec(
            num_scalar_prefetch=0,
            grid=grid,
            in_specs=[
                pl.BlockSpec((bt, d), lambda i: (i, 0)),
                pl.BlockSpec((bt, lw), lambda i: (i, 0)),
            ],
            out_specs=pl.BlockSpec((bt, w), lambda i: (i, 0)),
        ),
        compiler_params=cparams,
        cost_estimate=cost,
    )(c2, l2)
    return out.reshape(*lead, w)


if __name__ == "__main__":
    key = jax.random.PRNGKey(0)
    k1, k2, k3, k4 = jax.random.split(key, 4)

    # GPT2 KV-cache splice: cache (batch, heads, seq, cache_len), line width 1.
    cache = jax.random.normal(k1, (2, 4, 16, 16), dtype=jnp.float32)
    line = jax.random.normal(k2, (2, 4, 16, 1), dtype=jnp.float32)

    splice_jit = jax.jit(splice)

    # f32: bit-exact (the kernel only moves data).
    out = jax.block_until_ready(splice_jit(cache, line))
    ref = jnp.concatenate([cache[..., 1:], line], axis=-1)
    assert out.shape == ref.shape, (out.shape, ref.shape)
    assert bool(jnp.array_equal(out, ref)), "splice mismatch (f32)"

    # bf16: native-dtype path, no f32 round-trip in the wrapper.
    cache_bf, line_bf = cache.astype(jnp.bfloat16), line.astype(jnp.bfloat16)
    out_bf = jax.block_until_ready(splice_jit(cache_bf, line_bf))
    ref_bf = jnp.concatenate([cache_bf[..., 1:], line_bf], axis=-1)
    assert out_bf.dtype == jnp.bfloat16
    assert bool(jnp.array_equal(out_bf, ref_bf)), "splice mismatch (bf16)"

    # Row count not a multiple of 128//d: wrapper pads rows so the lane-dense
    # path is still taken (review: avoid the g=1 perf cliff).
    cache_odd = jax.random.normal(k3, (3, 5, 16), dtype=jnp.float32)
    line_odd = jax.random.normal(k4, (3, 5, 1), dtype=jnp.float32)
    out_odd = jax.block_until_ready(splice_jit(cache_odd, line_odd))
    ref_odd = jnp.concatenate([cache_odd[..., 1:], line_odd], axis=-1)
    assert bool(jnp.array_equal(out_odd, ref_odd)), "splice mismatch (padded rows)"

    # Donated-cache variant (input_output_aliases={0: 0}).
    splice_donate = jax.jit(lambda c, l: splice(c, l, donate_cache=True))
    out_dn = jax.block_until_ready(splice_donate(cache, line))
    assert bool(jnp.array_equal(out_dn, ref)), "splice mismatch (donated cache)"

    print("KERNEL_OK")
</pallas_src>

<mosaic_0001>
module attributes {stable_mosaic.version = 11 : i64} {
  func.func @kernel(%arg0: i32, %arg1: memref<16x128xf32, #tpu.memory_space<vmem>>, %arg2: memref<16x8xf32, #tpu.memory_space<vmem>>, %arg3: memref<16x128xf32, #tpu.memory_space<vmem>>) attributes {dimension_semantics = [#tpu.dimension_semantics<parallel>], iteration_bounds = array<i64: 1>, scalar_prefetch = 0 : i64, scratch_operands = 0 : i64, tpu.core_type = #tpu.core_type<tc>, window_params = [{transform_indices = @transform_0, window_bounds = array<i64: 16, 128>}, {transform_indices = @transform_1, window_bounds = array<i64: 16, 8>}, {transform_indices = @transform_2, window_bounds = array<i64: 16, 128>}]} {
    %c0 = arith.constant 0 : index
    %c0_0 = arith.constant 0 : index
    %0 = vector.load %arg1[%c0, %c0_0] : memref<16x128xf32, #tpu.memory_space<vmem>>, vector<16x128xf32>
    %c127_i32 = arith.constant 127 : i32
    %1 = tpu.dynamic_rotate %0 by %c127_i32 dim 1 : vector<16x128xf32>, i32 -> vector<16x128xf32>
    %2 = tpu.iota {dimensions = array<i32: 1>} : vector<16x128xi32>
    %c15_i32 = arith.constant 15 : i32
    %3 = vector.broadcast %c15_i32 : i32 to vector<16x128xi32>
    %4 = arith.cmpi eq, %2, %3 : vector<16x128xi32>
    %c0_1 = arith.constant 0 : index
    %c0_2 = arith.constant 0 : index
    %5 = vector.load %arg2[%c0_1, %c0_2] : memref<16x8xf32, #tpu.memory_space<vmem>>, vector<16x1xf32>
    %6 = vector.shape_cast %5 : vector<16x1xf32> to vector<16x1xf32>
    %7 = vector.broadcast %6 : vector<16x1xf32> to vector<16x128xf32>
    %8 = arith.select %4, %7, %1 : vector<16x128xi1>, vector<16x128xf32>
    %c31_i32 = arith.constant 31 : i32
    %9 = vector.broadcast %c31_i32 : i32 to vector<16x128xi32>
    %10 = arith.cmpi eq, %2, %9 : vector<16x128xi32>
    %c0_3 = arith.constant 0 : index
    %c1 = arith.constant 1 : index
    %11 = vector.load %arg2[%c0_3, %c1] : memref<16x8xf32, #tpu.memory_space<vmem>>, vector<16x1xf32>
    %12 = vector.shape_cast %11 : vector<16x1xf32> to vector<16x1xf32>
    %13 = vector.broadcast %12 : vector<16x1xf32> to vector<16x128xf32>
    %14 = arith.select %10, %13, %8 : vector<16x128xi1>, vector<16x128xf32>
    %c47_i32 = arith.constant 47 : i32
    %15 = vector.broadcast %c47_i32 : i32 to vector<16x128xi32>
    %16 = arith.cmpi eq, %2, %15 : vector<16x128xi32>
    %c0_4 = arith.constant 0 : index
    %c2 = arith.constant 2 : index
    %17 = vector.load %arg2[%c0_4, %c2] : memref<16x8xf32, #tpu.memory_space<vmem>>, vector<16x1xf32>
    %18 = vector.shape_cast %17 : vector<16x1xf32> to vector<16x1xf32>
    %19 = vector.broadcast %18 : vector<16x1xf32> to vector<16x128xf32>
    %20 = arith.select %16, %19, %14 : vector<16x128xi1>, vector<16x128xf32>
    %c63_i32 = arith.constant 63 : i32
    %21 = vector.broadcast %c63_i32 : i32 to vector<16x128xi32>
    %22 = arith.cmpi eq, %2, %21 : vector<16x128xi32>
    %c0_5 = arith.constant 0 : index
    %c3 = arith.constant 3 : index
    %23 = vector.load %arg2[%c0_5, %c3] : memref<16x8xf32, #tpu.memory_space<vmem>>, vector<16x1xf32>
    %24 = vector.shape_cast %23 : vector<16x1xf32> to vector<16x1xf32>
    %25 = vector.broadcast %24 : vector<16x1xf32> to vector<16x128xf32>
    %26 = arith.select %22, %25, %20 : vector<16x128xi1>, vector<16x128xf32>
    %c79_i32 = arith.constant 79 : i32
    %27 = vector.broadcast %c79_i32 : i32 to vector<16x128xi32>
    %28 = arith.cmpi eq, %2, %27 : vector<16x128xi32>
    %c0_6 = arith.constant 0 : index
    %c4 = arith.constant 4 : index
    %29 = vector.load %arg2[%c0_6, %c4] : memref<16x8xf32, #tpu.memory_space<vmem>>, vector<16x1xf32>
    %30 = vector.shape_cast %29 : vector<16x1xf32> to vector<16x1xf32>
    %31 = vector.broadcast %30 : vector<16x1xf32> to vector<16x128xf32>
    %32 = arith.select %28, %31, %26 : vector<16x128xi1>, vector<16x128xf32>
    %c95_i32 = arith.constant 95 : i32
    %33 = vector.broadcast %c95_i32 : i32 to vector<16x128xi32>
    %34 = arith.cmpi eq, %2, %33 : vector<16x128xi32>
    %c0_7 = arith.constant 0 : index
    %c5 = arith.constant 5 : index
    %35 = vector.load %arg2[%c0_7, %c5] : memref<16x8xf32, #tpu.memory_space<vmem>>, vector<16x1xf32>
    %36 = vector.shape_cast %35 : vector<16x1xf32> to vector<16x1xf32>
    %37 = vector.broadcast %36 : vector<16x1xf32> to vector<16x128xf32>
    %38 = arith.select %34, %37, %32 : vector<16x128xi1>, vector<16x128xf32>
    %c111_i32 = arith.constant 111 : i32
    %39 = vector.broadcast %c111_i32 : i32 to vector<16x128xi32>
    %40 = arith.cmpi eq, %2, %39 : vector<16x128xi32>
    %c0_8 = arith.constant 0 : index
    %c6 = arith.constant 6 : index
    %41 = vector.load %arg2[%c0_8, %c6] : memref<16x8xf32, #tpu.memory_space<vmem>>, vector<16x1xf32>
    %42 = vector.shape_cast %41 : vector<16x1xf32> to vector<16x1xf32>
    %43 = vector.broadcast %42 : vector<16x1xf32> to vector<16x128xf32>
    %44 = arith.select %40, %43, %38 : vector<16x128xi1>, vector<16x128xf32>
    %c127_i32_9 = arith.constant 127 : i32
    %45 = vector.broadcast %c127_i32_9 : i32 to vector<16x128xi32>
    %46 = arith.cmpi eq, %2, %45 : vector<16x128xi32>
    %c0_10 = arith.constant 0 : index
    %c7 = arith.constant 7 : index
    %47 = vector.load %arg2[%c0_10, %c7] : memref<16x8xf32, #tpu.memory_space<vmem>>, vector<16x1xf32>
    %48 = vector.shape_cast %47 : vector<16x1xf32> to vector<16x1xf32>
    %49 = vector.broadcast %48 : vector<16x1xf32> to vector<16x128xf32>
    %50 = arith.select %46, %49, %44 : vector<16x128xi1>, vector<16x128xf32>
    %c0_11 = arith.constant 0 : index
    %c0_12 = arith.constant 0 : index
    %51 = vector.load %arg3[%c0_11, %c0_12] : memref<16x128xf32, #tpu.memory_space<vmem>>, vector<16x128xf32>
    tpu.vector_store %arg3[%c0_11, %c0_12], %50 {strides = array<i32>} : memref<16x128xf32, #tpu.memory_space<vmem>>, vector<16x128xf32>,
    return
  }
  func.func @transform_0(%arg0: i32) -> (i32, i32) {
    %c0_i32 = arith.constant 0 : i32
    %c0_i32_0 = arith.constant 0 : i32
    return %arg0, %c0_i32 : i32, i32
  }
  func.func @transform_1(%arg0: i32) -> (i32, i32) {
    %c0_i32 = arith.constant 0 : i32
    %c0_i32_0 = arith.constant 0 : i32
    return %arg0, %c0_i32 : i32, i32
  }
  func.func @transform_2(%arg0: i32) -> (i32, i32) {
    %c0_i32 = arith.constant 0 : i32
    %c0_i32_0 = arith.constant 0 : i32
    return %arg0, %c0_i32 : i32, i32
  }
}

</mosaic_0001>

<llo_original>
// kernel: splice.1
$region0: #{splice.1}
  #allocation0 [shape = 'u32[]', space=smem, size = 0x4, offset = 0x4, fixed_abs, tag = 'smem constant byte address 0x4 - core index']
  #allocation1 [shape = 'u32[144,128]{1,0:T(1,128)}', space=vmem, size = 0x12000, scoped, tag = 'internal scratch']
  %s0 = inlined_call_operand.vmem [shape: f32[16,128], index: 0, kind: input, shape index: {}]
  %s1 = inlined_call_operand.vmem [shape: f32[16,8], index: 1, kind: input, shape index: {}]
  %s2 = inlined_call_operand.vmem [shape: f32[16,128], index: 2, kind: output, shape index: {}]
  %s3 = sld [smem:[#allocation0]]
  $region18: #{splice.1} parent=0
    _
  %s5 = ssub.s32 1, %s3
  %s6 = scalar_select 0, %s5, %s3
  // Predicated region
  $region2: #{splice.1} parent=0 // pred_check
    _
  $region3: #{splice.1} parent=0 // pred_check_branch
    %8 = sbr.rel (0) target = $region5
  $region4: #{splice.1} parent=0 // pred_region
    _
  $region5: #{splice.1} parent=0 // pred_fallthru
    _
  // Predicated region
  $region6: #{splice.1} parent=0 // pred_check
    _
  $region7: #{splice.1} parent=0 // pred_check_branch
    %10 = sbr.rel (0) target = $region9
  $region8: #{splice.1} parent=0 // pred_region
    _
  $region9: #{splice.1} parent=0 // pred_fallthru
    _
  %v11 = vld [vmem:[%s0] sm:$0xff]
  %v12 = vld [vmem:[%s0 + $0x8] sm:$0xff]
  %13 = vrot.lane.b32.xlu0 %v11, 127
  %v14 = vpop.permute.xlu0 %13
  %15 = vrot.lane.b32.xlu0 %v12, 127
  %v16 = vpop.permute.xlu0 %15
  %v17 = vlaneseq
  %v18 = vand.u32 %v17, 127
  %vm19 = vcmp.eq.s32.totalorder %v18, 15
  %v20 = vld [vmem:[%s1] sm:$0xff]
  %v21 = vld [vmem:[%s1 + $0x8] sm:$0xff]
  %23 = vset.pattern.permute.xlu0 0
  %24 = vperm.xlu0 %23, %v20
  %v25 = vpop.permute.xlu0 %24
  %28 = vset.pattern.permute.xlu0 0
  %29 = vperm.xlu0 %28, %v21
  %v30 = vpop.permute.xlu0 %29
  %v32 = vsel %vm19, %v25, %v14
  %v33 = vsel %vm19, %v30, %v16
  %vm34 = vcmp.eq.s32.totalorder %v18, 31
  %35 = vset.pattern.permute.xlu0 1
  %36 = vperm.xlu0 %35, %v20
  %v37 = vpop.permute.xlu0 %36
  %39 = vset.pattern.permute.xlu0 1
  %40 = vperm.xlu0 %39, %v21
  %v41 = vpop.permute.xlu0 %40
  %v43 = vsel %vm34, %v37, %v32
  %v44 = vsel %vm34, %v41, %v33
  %vm45 = vcmp.eq.s32.totalorder %v18, 47
  %46 = vset.pattern.permute.xlu0 2
  %47 = vperm.xlu0 %46, %v20
  %v48 = vpop.permute.xlu0 %47
  %50 = vset.pattern.permute.xlu0 2
  %51 = vperm.xlu0 %50, %v21
  %v52 = vpop.permute.xlu0 %51
  %v54 = vsel %vm45, %v48, %v43
  %v55 = vsel %vm45, %v52, %v44
  %vm56 = vcmp.eq.s32.totalorder %v18, 63
  %57 = vset.pattern.permute.xlu0 3
  %58 = vperm.xlu0 %57, %v20
  %v59 = vpop.permute.xlu0 %58
  %61 = vset.pattern.permute.xlu0 3
  %62 = vperm.xlu0 %61, %v21
  %v63 = vpop.permute.xlu0 %62
  %v65 = vsel %vm56, %v59, %v54
  %v66 = vsel %vm56, %v63, %v55
  %vm67 = vcmp.eq.s32.totalorder %v18, 79
  %68 = vset.pattern.permute.xlu0 4
  %69 = vperm.xlu0 %68, %v20
  %v70 = vpop.permute.xlu0 %69
  %72 = vset.pattern.permute.xlu0 4
  %73 = vperm.xlu0 %72, %v21
  %v74 = vpop.permute.xlu0 %73
  %v76 = vsel %vm67, %v70, %v65
  %v77 = vsel %vm67, %v74, %v66
  %vm78 = vcmp.eq.s32.totalorder %v18, 95
  %79 = vset.pattern.permute.xlu0 5
  %80 = vperm.xlu0 %79, %v20
  %v81 = vpop.permute.xlu0 %80
  %83 = vset.pattern.permute.xlu0 5
  %84 = vperm.xlu0 %83, %v21
  %v85 = vpop.permute.xlu0 %84
  %v87 = vsel %vm78, %v81, %v76
  %v88 = vsel %vm78, %v85, %v77
  %vm89 = vcmp.eq.s32.totalorder %v18, 111
  %90 = vset.pattern.permute.xlu0 6
  %91 = vperm.xlu0 %90, %v20
  %v92 = vpop.permute.xlu0 %91
  %94 = vset.pattern.permute.xlu0 6
  %95 = vperm.xlu0 %94, %v21
  %v96 = vpop.permute.xlu0 %95
  %v98 = vsel %vm89, %v92, %v87
  %v99 = vsel %vm89, %v96, %v88
  %vm100 = vcmp.eq.s32.totalorder %v18, 127
  %101 = vset.pattern.permute.xlu0 7
  %102 = vperm.xlu0 %101, %v20
  %v103 = vpop.permute.xlu0 %102
  %105 = vset.pattern.permute.xlu0 7
  %106 = vperm.xlu0 %105, %v21
  %v107 = vpop.permute.xlu0 %106
  %v109 = vsel %vm100, %v103, %v98
  %v110 = vsel %vm100, %v107, %v99
  %111 = vst [vmem:[%s2] sm:$0xff] %v109
  %112 = vst [vmem:[%s2 + $0x8] sm:$0xff] %v110
  // Predicated region
  $region10: #{splice.1} parent=0 // pred_check
    _
  $region11: #{splice.1} parent=0 // pred_check_branch
    %114 = sbr.rel (0) target = $region13
  $region12: #{splice.1} parent=0 // pred_region
    _
  $region13: #{splice.1} parent=0 // pred_fallthru
    _
  // Predicated region
  $region14: #{splice.1} parent=0 // pred_check
    _
  $region15: #{splice.1} parent=0 // pred_check_branch
    %116 = sbr.rel (0) target = $region17
  $region16: #{splice.1} parent=0 // pred_region
    _
  $region17: #{splice.1} parent=0 // pred_fallthru
    _

</llo_original>
